<compile_context>
chip_gen: v6e
topology: v6e:2x2x1
jax: 0.10.0
libtpu: 0.0.40
codegen_flags: <defaults>
</compile_context>

<pallas_src>
import functools

import jax
import jax.numpy as jnp
from jax.experimental import pallas as pl
from jax.experimental.pallas import tpu as pltpu

_LANE = 128
_VMEM_TILE_BUDGET = 20 << 20       # working-set target, safe on v5e/v6e/v7x
_VMEM_LIMIT_CAP = 48 << 20         # stay well under v7x's 64 MiB physical VMEM
_TINY_FALLBACK_ELEMS = 1 << 15     # below this, XLA's dot beats pallas overhead


def _round_up(x, m):
    return (x + m - 1) // m * m


# ----------------------------------------------------------------------------
# Pallas kernel: one M-tile of  logits = x @ W + b  (whole K and C per block)
# ----------------------------------------------------------------------------
def _linear_bias_kernel(x_ref, w_ref, b_ref, o_ref, *, compute_dtype):
    # x_ref: (tm, D) native dtype | w_ref: (D, C) compute dtype | b_ref: (1, C) f32
    x = x_ref[...]
    if x.dtype != compute_dtype:
        x = x.astype(compute_dtype)            # VPU cast, overlapped with DMA
    acc = jnp.dot(x, w_ref[...], preferred_element_type=jnp.float32)
    o_ref[...] = (acc + b_ref[...]).astype(o_ref.dtype)


def fused_linear(x2d, w_c, b2d, *, compute_dtype=jnp.bfloat16,
                 out_dtype=jnp.float32):
    """logits = x2d @ w_c + b2d as one Pallas matmul.

    x2d:  [M, D]   (any float dtype; cast to compute_dtype in-kernel)
    w_c:  [D, C]   (already in compute_dtype — pre-cast once at model init)
    b2d:  [1, C]   (float32)
    ->    [M, C]   (out_dtype)
    """
    M, D = x2d.shape
    D2, C = w_c.shape
    assert D == D2, (D, D2)
    assert b2d.shape == (1, C), b2d.shape

    def _xla_fallback():
        acc = jnp.dot(x2d.astype(compute_dtype), w_c,
                      preferred_element_type=jnp.float32)
        return (acc + b2d).astype(out_dtype)

    # Sub-tile problems: fixed pallas_call/pipeline overhead dominates.
    if M < 16 or M * D * C < _TINY_FALLBACK_ELEMS:
        return _xla_fallback()

    x_bytes = jnp.dtype(x2d.dtype).itemsize
    w_bytes = jnp.dtype(w_c.dtype).itemsize
    o_bytes = jnp.dtype(out_dtype).itemsize

    # ---- tile selection (VMEM-budgeted, whole contraction in one block) ----
    dp = _round_up(D, _LANE)                        # layout-padded sizes
    cp = _round_up(C, _LANE)
    fixed = 2 * (dp * cp * w_bytes + cp * 4)        # W + bias buffers
    per_row = 2 * (dp * x_bytes + cp * o_bytes)     # x + out, double-buffered
    if fixed + 16 * per_row > _VMEM_LIMIT_CAP:
        # TODO(synk): add a K-tiled accumulator path for very large D*C heads.
        return _xla_fallback()

    tm = 512
    while tm > 16 and fixed + tm * per_row > _VMEM_TILE_BUDGET:
        tm //= 2
    tm = max(16, min(tm, _round_up(M, 16)))
    # v7x megacore: keep >= 2 parallel output blocks when M allows.
    if pl.cdiv(M, tm) < 2 and M > 32:
        tm = _round_up(pl.cdiv(M, 2), 16)

    vmem_limit = int(min(max(2 * (fixed + tm * per_row) + (8 << 20), 32 << 20),
                         _VMEM_LIMIT_CAP))

    cost = pl.CostEstimate(
        flops=2 * M * D * C,
        transcendentals=0,
        bytes_accessed=M * D * x_bytes + D * C * w_bytes + C * 4
                       + M * C * o_bytes,
    )

    kernel = functools.partial(_linear_bias_kernel, compute_dtype=compute_dtype)
    return pl.pallas_call(
        kernel,
        out_shape=jax.ShapeDtypeStruct((M, C), out_dtype),
        grid_spec=pltpu.PrefetchScalarGridSpec(
            num_scalar_prefetch=0,
            grid=(pl.cdiv(M, tm),),
            in_specs=[
                pl.BlockSpec((tm, D), lambda i: (i, 0)),   # x: streamed once
                pl.BlockSpec((D, C), lambda i: (0, 0)),    # W: fetched once
                pl.BlockSpec((1, C), lambda i: (0, 0)),    # bias: fetched once
            ],
            out_specs=pl.BlockSpec((tm, C), lambda i: (i, 0)),
        ),
        compiler_params=pltpu.CompilerParams(
            dimension_semantics=("parallel",),
            vmem_limit_bytes=vmem_limit,
        ),
        cost_estimate=cost,
    )(x2d, w_c, b2d)


# ----------------------------------------------------------------------------
# "Model" being wrapped: linear few-shot head with deterministic params.
# ----------------------------------------------------------------------------
class LinearModel:
    def __init__(self, d, c, dtype=jnp.float32, compute_dtype=jnp.bfloat16):
        kw, _ = jax.random.split(jax.random.PRNGKey(42))
        self.w = (0.02 * jax.random.normal(kw, (d, c))).astype(dtype)
        self.b = jnp.arange(c, dtype=jnp.float32) * 0.01
        self.compute_dtype = compute_dtype
        # Pre-cast ONCE at init: no per-forward convert/pad pass over weights.
        self.w_c = self.w.astype(compute_dtype)
        self.b2d = self.b.reshape(1, c).astype(jnp.float32)

    def __call__(self, x):
        # Single-task forward: (N, D) -> {"logits": (N, C)}
        return {"logits": fused_linear(x, self.w_c, self.b2d,
                                       compute_dtype=self.compute_dtype)}

    def batched(self, x):
        # Stacked meta-batch (T, N, D): collapse T*N into the matmul M
        # dimension — one Pallas call, reshape back (== default_collate/stack).
        t, n, d = x.shape
        logits = fused_linear(x.reshape(t * n, d), self.w_c, self.b2d,
                              compute_dtype=self.compute_dtype)
        return {"logits": logits.reshape(t, n, -1)}

    def batched_list(self, xs):
        # Ragged meta-batch (list of (N_i, D)): one fused call over the
        # row-concatenated tasks, split per task afterwards.
        # TODO(synk): replace concatenate with a scalar-prefetch row-offset
        # index_map so ragged tiles DMA straight from each task's buffer.
        sizes = [int(xi.shape[0]) for xi in xs]
        logits = fused_linear(jnp.concatenate(xs, axis=0), self.w_c, self.b2d,
                              compute_dtype=self.compute_dtype)
        out, off = [], 0
        for n in sizes:
            out.append({"logits": logits[off:off + n]})
            off += n
        return out


# ----------------------------------------------------------------------------
# MetabatchWrapper equivalent
# ----------------------------------------------------------------------------
def multi_size_collate(batches):
    """Collate outputs whose tensors may have different shapes per task."""
    keys = batches[0].keys()
    return {k: [batch[k] for batch in batches] for k in keys}


class MetabatchWrapper:
    """Processes meta-batches: collections of tasks rather than a single batch."""

    def __init__(self, model):
        self.model = model

    def __call__(self, **kwargs):
        keys = list(kwargs.keys())
        first = kwargs[keys[0]]
        if isinstance(first, jnp.ndarray):
            # Stacked-tensor meta-batch: per-task forward + default_collate
            # (stack along task dim) fused into ONE Pallas matmul over T*N rows.
            return self.model.batched(**kwargs)
        # Ragged list meta-batch: one fused call over the concatenated tasks,
        # then multi_size_collate of the per-task outputs.
        outputs = self.model.batched_list(list(first))
        return multi_size_collate(outputs)


# ----------------------------------------------------------------------------
if __name__ == "__main__":
    T, N, D, C = 2, 64, 128, 16
    key = jax.random.PRNGKey(0)
    kx, k1, k2 = jax.random.split(key, 3)
    x = jax.random.normal(kx, (T, N, D), dtype=jnp.float32)

    model = LinearModel(D, C)
    wrapper = MetabatchWrapper(model)

    # Reference path: same bf16 MXU inputs, f32 accumulation.
    def ref_logits(xi):
        return jnp.dot(xi.astype(jnp.bfloat16), model.w_c,
                       preferred_element_type=jnp.float32) + model.b

    # 1) Stacked-tensor meta-batch (default_collate == stack): one Pallas call.
    out = wrapper(x=x)
    logits = jax.block_until_ready(out["logits"])
    assert logits.shape == (T, N, C)
    ref = ref_logits(x.reshape(T * N, D)).reshape(T, N, C)
    assert jnp.allclose(logits, ref, atol=1e-2, rtol=1e-2), float(
        jnp.max(jnp.abs(logits - ref)))

    # 2) Ragged list meta-batch (multi_size_collate): still one fused call.
    x_list = [
        jax.random.normal(k1, (24, D), dtype=jnp.float32),
        jax.random.normal(k2, (72, D), dtype=jnp.float32),
    ]
    out_list = wrapper(x=x_list)
    assert isinstance(out_list["logits"], list) and len(out_list["logits"]) == 2
    for xt, lt in zip(x_list, out_list["logits"]):
        lt = jax.block_until_ready(lt)
        rt = ref_logits(xt)
        assert lt.shape == (xt.shape[0], C)
        assert jnp.allclose(lt, rt, atol=1e-2, rtol=1e-2)

    print("KERNEL_OK")
</pallas_src>

<mosaic_0001>
module attributes {stable_mosaic.version = 11 : i64} {
  func.func @_linear_bias_kernel(%arg0: i32, %arg1: memref<64x128xf32, #tpu.memory_space<vmem>>, %arg2: memref<128x16xbf16, #tpu.memory_space<vmem>>, %arg3: memref<1x16xf32, #tpu.memory_space<vmem>>, %arg4: memref<64x16xf32, #tpu.memory_space<vmem>>) attributes {dimension_semantics = [#tpu.dimension_semantics<parallel>], iteration_bounds = array<i64: 2>, scalar_prefetch = 0 : i64, scratch_operands = 0 : i64, tpu.core_type = #tpu.core_type<tc>, window_params = [{transform_indices = @transform_0, window_bounds = array<i64: 64, 128>}, {pipeline_mode = #tpu.pipeline_mode<synchronous>, transform_indices = @transform_1, window_bounds = array<i64: 128, 16>}, {pipeline_mode = #tpu.pipeline_mode<synchronous>, transform_indices = @transform_2, window_bounds = array<i64: 1, 16>}, {transform_indices = @transform_3, window_bounds = array<i64: 64, 16>}]} {
    %c0 = arith.constant 0 : index
    %c0_0 = arith.constant 0 : index
    %0 = vector.load %arg1[%c0, %c0_0] : memref<64x128xf32, #tpu.memory_space<vmem>>, vector<64x128xf32>
    %1 = arith.truncf %0 : vector<64x128xf32> to vector<64x128xbf16>
    %c0_1 = arith.constant 0 : index
    %c0_2 = arith.constant 0 : index
    %2 = vector.load %arg2[%c0_1, %c0_2] : memref<128x16xbf16, #tpu.memory_space<vmem>>, vector<128x16xbf16>
    %cst = arith.constant dense<0.000000e+00> : vector<64x16xf32>
    %3 = tpu.matmul %1, %2, %cst {dimension_numbers = #tpu.dot_dimension_numbers<[1], [0], [0], [1], [0, 0, 1, 1], [], []>} : vector<64x128xbf16>, vector<128x16xbf16>, vector<64x16xf32> -> vector<64x16xf32>
    %c0_3 = arith.constant 0 : index
    %c0_4 = arith.constant 0 : index
    %4 = vector.load %arg3[%c0_3, %c0_4] : memref<1x16xf32, #tpu.memory_space<vmem>>, vector<1x16xf32>
    %5 = vector.broadcast %4 : vector<1x16xf32> to vector<64x16xf32>
    %6 = arith.addf %3, %5 : vector<64x16xf32>
    %c0_5 = arith.constant 0 : index
    %c0_6 = arith.constant 0 : index
    %7 = vector.load %arg4[%c0_5, %c0_6] : memref<64x16xf32, #tpu.memory_space<vmem>>, vector<64x16xf32>
    tpu.vector_store %arg4[%c0_5, %c0_6], %6 {strides = array<i32>} : memref<64x16xf32, #tpu.memory_space<vmem>>, vector<64x16xf32>,
    return
  }
  func.func @transform_0(%arg0: i32) -> (i32, i32) {
    %c0_i32 = arith.constant 0 : i32
    %c0_i32_0 = arith.constant 0 : i32
    return %arg0, %c0_i32 : i32, i32
  }
  func.func @transform_1(%arg0: i32) -> (i32, i32) {
    %c0_i32 = arith.constant 0 : i32
    %c0_i32_0 = arith.constant 0 : i32
    %c0_i32_1 = arith.constant 0 : i32
    return %c0_i32, %c0_i32_0 : i32, i32
  }
  func.func @transform_2(%arg0: i32) -> (i32, i32) {
    %c0_i32 = arith.constant 0 : i32
    %c0_i32_0 = arith.constant 0 : i32
    %c0_i32_1 = arith.constant 0 : i32
    return %c0_i32, %c0_i32_0 : i32, i32
  }
  func.func @transform_3(%arg0: i32) -> (i32, i32) {
    %c0_i32 = arith.constant 0 : i32
    %c0_i32_0 = arith.constant 0 : i32
    return %arg0, %c0_i32 : i32, i32
  }
}

</mosaic_0001>

<llo_original>
// kernel: tpu_custom_call.1
$region0: #{tpu_custom_call.1}
  #allocation0 [shape = 'u32[]', space=smem, size = 0x4, offset = 0x4, fixed_abs, tag = 'smem constant byte address 0x4 - core index']
  #allocation1 [shape = 'u32[144,128]{1,0:T(1,128)}', space=vmem, size = 0x12000, scoped, tag = 'internal scratch']
  %s0 = inlined_call_operand.hbm [shape: f32[128,128], index: 0, kind: input, shape index: {}]
  %s1 = inlined_call_operand.vmem [shape: bf16[128,16], index: 1, kind: input, shape index: {}]
  %s2 = inlined_call_operand.vmem [shape: f32[1,16], index: 2, kind: input, shape index: {}]
  %s3 = inlined_call_operand.vmem [shape: f32[128,16], index: 3, kind: output, shape index: {}]
  %s4 = sld [smem:[#allocation0]]
  $region49: #{tpu_custom_call.1} parent=0
    _
  %s6 = ssub.s32 1, %s4
  %s7 = scalar_select 0, %s6, %s4
  $region1: #{tpu_custom_call.1} parent=0
    #allocation2 [shape = 'u8[65536]{0}', space=vmem, size = 0x10000, scoped, tag = 'input window, operand 0']
    #allocation3 [shape = 's32[2]{0}', space=sflag, size = 0x8, scoped, tag = 'scoped memory for tpu_custom_call.1']
    %8 = vsyncpa [#allocation3], 0
    %s9 = scalar_lea.sflag [#allocation3], 1
    %10 = vsyncpa %s9, 0
    loop: start=0, step=1, limit=4
    $region2: #{tpu_custom_call.1} parent=1 // loop_pre_header
      _
    $region3: #{tpu_custom_call.1} parent=1 // loop_header
      %s12 = sphi 0, %s16
      %p13 = scmp.ge.s32.totalorder %s12, 4
      %s22 = sphi 0, %s24
      %s25 = sphi 0, %s22
      %s26 = sphi 0, %s25
      %s42 = sphi 0, %s26
      %s46 = sphi 0, %s46
      %s48 = sphi 0, %s46
      %s49 = sphi 0, %s48
      %s63 = sphi 0, %s49
      %s67 = sphi 0, %s67
      %s69 = sphi 0, %s67
      %s70 = sphi 0, %s69
      %s84 = sphi 0, %s70
      %s90 = sphi 0, %s92
      %s93 = sphi 0, %s90
      %s94 = sphi 0, %s93
      %s110 = sphi 0, %s94
    $region4: #{tpu_custom_call.1} parent=1 // loop_header_branch
      %15 = sbr.rel (%p13) target = $region8
    $region5: #{tpu_custom_call.1} parent=1 // loop_body
      %s17 = ssub.s32 %s12, 1
      %s18 = ssub.s32 %s12, 2
      %s19 = sadd.s32 %s12, 1
      %s20 = ssub.s32 %s12, %s19
      %p21 = scmp.eq.s32.totalorder %s20, 0
      %s23 = sadd.s32 %s22, 1
      %s24 = scalar_select %p21, %s22, %s23
      %p27 = pneg %p21
      %p28 = scmp.eq.s32.totalorder %s12, 1
      %p29 = por %p27, %p28
      %p30 = scmp.ne.s32.totalorder %s22, %s25
      %p31 = scmp.eq.s32.totalorder %s12, 0
      %p32 = por %p30, %p31
      %p33 = scmp.ne.s32.totalorder %s22, %s25
      %p34 = scmp.eq.s32.totalorder %s17, 1
      %p35 = por %p33, %p34
      %p36 = scmp.ne.s32.totalorder %s25, %s26
      %p37 = scmp.eq.s32.totalorder %s17, 0
      %p38 = por %p36, %p37
      %p39 = scmp.ne.s32.totalorder %s25, %s26
      %p40 = scmp.eq.s32.totalorder %s18, 1
      %p41 = por %p39, %p40
      %p43 = scmp.ne.s32.totalorder %s26, %s42
      %p44 = scmp.eq.s32.totalorder %s18, 0
      %p45 = por %p43, %p44
      %s47 = sadd.s32 %s46, 1
      %p50 = scmp.eq.s32.totalorder %s12, 1
      %p51 = scmp.ne.s32.totalorder %s46, %s48
      %p52 = scmp.eq.s32.totalorder %s12, 0
      %p53 = por %p51, %p52
      %p54 = scmp.ne.s32.totalorder %s46, %s48
      %p55 = scmp.eq.s32.totalorder %s17, 1
      %p56 = por %p54, %p55
      %p57 = scmp.ne.s32.totalorder %s48, %s49
      %p58 = scmp.eq.s32.totalorder %s17, 0
      %p59 = por %p57, %p58
      %p60 = scmp.ne.s32.totalorder %s48, %s49
      %p61 = scmp.eq.s32.totalorder %s18, 1
      %p62 = por %p60, %p61
      %p64 = scmp.ne.s32.totalorder %s49, %s63
      %p65 = scmp.eq.s32.totalorder %s18, 0
      %p66 = por %p64, %p65
      %s68 = sadd.s32 %s67, 1
      %p71 = scmp.eq.s32.totalorder %s12, 1
      %p72 = scmp.ne.s32.totalorder %s67, %s69
      %p73 = scmp.eq.s32.totalorder %s12, 0
      %p74 = por %p72, %p73
      %p75 = scmp.ne.s32.totalorder %s67, %s69
      %p76 = scmp.eq.s32.totalorder %s17, 1
      %p77 = por %p75, %p76
      %p78 = scmp.ne.s32.totalorder %s69, %s70
      %p79 = scmp.eq.s32.totalorder %s17, 0
      %p80 = por %p78, %p79
      %p81 = scmp.ne.s32.totalorder %s69, %s70
      %p82 = scmp.eq.s32.totalorder %s18, 1
      %p83 = por %p81, %p82
      %p85 = scmp.ne.s32.totalorder %s70, %s84
      %p86 = scmp.eq.s32.totalorder %s18, 0
      %p87 = por %p85, %p86
      %s88 = ssub.s32 %s12, %s19
      %p89 = scmp.eq.s32.totalorder %s88, 0
      %s91 = sadd.s32 %s90, 1
      %s92 = scalar_select %p89, %s90, %s91
      %p95 = pneg %p89
      %p96 = scmp.eq.s32.totalorder %s12, 1
      %p97 = por %p95, %p96
      %p98 = scmp.ne.s32.totalorder %s90, %s93
      %p99 = scmp.eq.s32.totalorder %s12, 0
      %p100 = por %p98, %p99
      %p101 = scmp.ne.s32.totalorder %s90, %s93
      %p102 = scmp.eq.s32.totalorder %s17, 1
      %p103 = por %p101, %p102
      %p104 = scmp.ne.s32.totalorder %s93, %s94
      %p105 = scmp.eq.s32.totalorder %s17, 0
      %p106 = por %p104, %p105
      %p107 = scmp.ne.s32.totalorder %s93, %s94
      %p108 = scmp.eq.s32.totalorder %s18, 1
      %p109 = por %p107, %p108
      %p111 = scmp.ne.s32.totalorder %s94, %s110
      %p112 = scmp.eq.s32.totalorder %s18, 0
      %p113 = por %p111, %p112
      %p114 = scmp.le.s32.totalorder 1, %s12
      %p115 = scmp.lt.s32.totalorder %s12, 3
      %p116 = pnand %p114, %p115
      %p117 = pneg %p116
      // Predicated region
      $region9: #{tpu_custom_call.1} parent=5 // pred_check
        _
      $region10: #{tpu_custom_call.1} parent=5 // pred_check_branch
        %119 = sbr.rel (%p116) target = $region12
      $region11: #{tpu_custom_call.1} parent=5 // pred_region
        %s120 = ssub.s32 %s12, 1
        // Predicated region
        $region13: #{tpu_custom_call.1} parent=11 // pred_check
          %p121 = pneg %p59
        $region14: #{tpu_custom_call.1} parent=11 // pred_check_branch
          %123 = sbr.rel (%p121) target = $region16
        $region15: #{tpu_custom_call.1} parent=11 // pred_region
          _
        $region16: #{tpu_custom_call.1} parent=11 // pred_fallthru
          _
        // Predicated region
        $region17: #{tpu_custom_call.1} parent=11 // pred_check
          %p124 = pneg %p80
        $region18: #{tpu_custom_call.1} parent=11 // pred_check_branch
          %126 = sbr.rel (%p124) target = $region20
        $region19: #{tpu_custom_call.1} parent=11 // pred_region
          _
        $region20: #{tpu_custom_call.1} parent=11 // pred_fallthru
          _
      $region12: #{tpu_custom_call.1} parent=5 // pred_fallthru
        _
      %p127 = scmp.lt.s32.totalorder %s12, 2
      // Predicated region
      $region21: #{tpu_custom_call.1} parent=5 // pred_check
        %p128 = pneg %p127
      $region22: #{tpu_custom_call.1} parent=5 // pred_check_branch
        %130 = sbr.rel (%p128) target = $region24
      $region23: #{tpu_custom_call.1} parent=5 // pred_region
        // Predicated region
        $region25: #{tpu_custom_call.1} parent=23 // pred_check
          %p131 = pneg %p32
        $region26: #{tpu_custom_call.1} parent=23 // pred_check_branch
          %133 = sbr.rel (%p131) target = $region28
        $region27: #{tpu_custom_call.1} parent=23 // pred_region
          %s134 = sand.u32 %s22, 1
          %s135 = scalar_lea.sflag [#allocation3], %s134
          %s136 = sand.u32 %s22, 1
          %s137 = smul.addr %s136, 64
          %s138 = scalar_lea.vmem [#allocation2], %s137
          %s139 = smul.u32 8, %s12
          %s141 = ssub.s32 1024, 1024
          %142 = vsyncadd %s135, %s141
          %s143 = smul.addr %s139, 128
          %s144 = scalar_lea.hbm %s0, %s143
          %s145 = sshll.u32 %s138, 4
          %s146 = int_to_ptr.vmem [resolvable:$true] %s145
          %151 = dma.hbm_to_vmem [thread:$0]  %s144, 1024, %s146, %s135, 128, 128, 8
        $region28: #{tpu_custom_call.1} parent=23 // pred_fallthru
          _
      $region24: #{tpu_custom_call.1} parent=5 // pred_fallthru
        _
      %p152 = scmp.le.s32.totalorder 1, %s12
      %p153 = scmp.lt.s32.totalorder %s12, 3
      %p154 = pnand %p152, %p153
      %p155 = pneg %p154
      // Predicated region
      $region29: #{tpu_custom_call.1} parent=5 // pred_check
        _
      $region30: #{tpu_custom_call.1} parent=5 // pred_check_branch
        %157 = sbr.rel (%p154) target = $region32
      $region31: #{tpu_custom_call.1} parent=5 // pred_region
        %s158 = ssub.s32 %s12, 1
        %s159 = sand.u32 %s25, 1
        %s160 = scalar_lea.sflag [#allocation3], %s159
        %s161 = sand.u32 %s25, 1
        %s162 = smul.addr %s161, 64
        %s163 = scalar_lea.vmem [#allocation2], %s162
        // Predicated region
        $region33: #{tpu_custom_call.1} parent=31 // pred_check
          %p164 = pneg %p38
        $region34: #{tpu_custom_call.1} parent=31 // pred_check_branch
          %166 = sbr.rel (%p164) target = $region36
        $region35: #{tpu_custom_call.1} parent=31 // pred_region
          %167 = dma.done %s160, 1024
        $region36: #{tpu_custom_call.1} parent=31 // pred_fallthru
          _
        %s168 = sand.u32 %s25, 1
        %s169 = scalar_lea.sflag [#allocation3], %s168
        %s170 = sand.u32 %s25, 1
        %s171 = smul.addr %s170, 64
        %s172 = scalar_lea.vmem [#allocation2], %s171
        %p173 = pneg %p38
        %p174 = pneg %p35
        %p175 = pneg %p59
        %p176 = pneg %p56
        %p177 = pneg %p80
        %p178 = pneg %p77
        %p179 = pneg %p106
        %p180 = pneg %p103
        %s181 = smul.u32 8, %s17
        %p182 = scmp.lt.s32.totalorder %s181, 15
        %s183 = scalar_select %p182, %s181, 15
        %s184 = smul.addr %s183, 8
        %s185 = scalar_lea.vmem %s3, %s184
        %s186 = smul.u32 8, %s17
        %s187 = smul.u32 8, %s17
        %p188 = scmp.lt.s32.totalorder %s187, 15
        %s189 = scalar_select %p188, %s187, 15
        %s190 = smul.addr %s189, 8
        %s191 = scalar_lea.vmem %s3, %s190
        %s192 = smul.u32 8, %s17
        %v194 = vld [vmem:[%s163] sm:$0xff]
        %v195 = vld [vmem:[%s163 + $0x8] sm:$0xff]
        %v196 = vld [vmem:[%s163 + $0x10] sm:$0xff]
        %v197 = vld [vmem:[%s163 + $0x18] sm:$0xff]
        %v198 = vld [vmem:[%s163 + $0x20] sm:$0xff]
        %v199 = vld [vmem:[%s163 + $0x28] sm:$0xff]
        %v200 = vld [vmem:[%s163 + $0x30] sm:$0xff]
        %v201 = vld [vmem:[%s163 + $0x38] sm:$0xff]
        %v202 = vpack.c.bf16 %v195, %v194
        %v203 = vpack.c.bf16 %v197, %v196
        %v204 = vpack.c.bf16 %v199, %v198
        %v205 = vpack.c.bf16 %v201, %v200
        %v206 = vld [vmem:[%s1] sm:$0xf]
        %v207 = vld [vmem:[%s1 + $0x4] sm:$0xf]
        %v208 = vld [vmem:[%s1 + $0x8] sm:$0xf]
        %v209 = vld [vmem:[%s1 + $0xc] sm:$0xf]
        %v210 = vld [vmem:[%s1 + $0x10] sm:$0xf]
        %v211 = vld [vmem:[%s1 + $0x14] sm:$0xf]
        %v212 = vld [vmem:[%s1 + $0x18] sm:$0xf]
        %v213 = vld [vmem:[%s1 + $0x1c] sm:$0xf]
        %v214 = vld [vmem:[%s1 + $0x20] sm:$0xf]
        %v215 = vld [vmem:[%s1 + $0x24] sm:$0xf]
        %v216 = vld [vmem:[%s1 + $0x28] sm:$0xf]
        %v217 = vld [vmem:[%s1 + $0x2c] sm:$0xf]
        %v218 = vld [vmem:[%s1 + $0x30] sm:$0xf]
        %v219 = vld [vmem:[%s1 + $0x34] sm:$0xf]
        %v220 = vld [vmem:[%s1 + $0x38] sm:$0xf]
        %v221 = vld [vmem:[%s1 + $0x3c] sm:$0xf]
        %v222 = vld [vmem:[%s2] sm:$0x1]
        %v224 = vlaneseq
        %v225 = vshrl.u32 %v224, 7
        %v226 = vsub.s32 0, %v225
        %v227 = vrot.slane %v222, %v226
        %v245 = vunpack.c.l.b16 %v206
        %v246 = vunpack.c.l.b16 %v207
        %v247 = vunpack.c.l.b16 %v208
        %v248 = vunpack.c.l.b16 %v209
        %v249 = vunpack.c.l.b16 %v210
        %v250 = vunpack.c.l.b16 %v211
        %v251 = vunpack.c.l.b16 %v212
        %v252 = vunpack.c.l.b16 %v213
        %v253 = vunpack.c.l.b16 %v214
        %v254 = vunpack.c.l.b16 %v215
        %v255 = vunpack.c.l.b16 %v216
        %v256 = vunpack.c.l.b16 %v217
        %v257 = vunpack.c.l.b16 %v218
        %v258 = vunpack.c.l.b16 %v219
        %v259 = vunpack.c.l.b16 %v220
        %v260 = vunpack.c.l.b16 %v221
        %v261 = vpack.c.b16 %v246, %v245
        %v262 = vpack.c.b16 %v248, %v247
        %v263 = vpack.c.b16 %v250, %v249
        %v264 = vpack.c.b16 %v252, %v251
        %v265 = vpack.c.b16 %v254, %v253
        %v266 = vpack.c.b16 %v256, %v255
        %v267 = vpack.c.b16 %v258, %v257
        %v268 = vpack.c.b16 %v260, %v259
        %277 = vmatprep.subr.bf16.mxu0 0
        %278 = vmatpush1.bf16.msra.mxu0 %v268
        %279 = vmatprep.subr.bf16.mxu0 0
        %280 = vmatpush1.bf16.msra.mxu0 %v267
        %281 = vmatprep.subr.bf16.mxu0 0
        %282 = vmatpush1.bf16.msra.mxu0 %v266
        %283 = vmatprep.subr.bf16.mxu0 0
        %284 = vmatpush1.bf16.msra.mxu0 %v265
        %285 = vmatprep.subr.bf16.mxu0 0
        %286 = vmatpush1.bf16.msra.mxu0 %v264
        %287 = vmatprep.subr.bf16.mxu0 0
        %288 = vmatpush1.bf16.msra.mxu0 %v263
        %289 = vmatprep.subr.bf16.mxu0 0
        %290 = vmatpush1.bf16.msra.mxu0 %v262
        %291 = vmatprep.subr.bf16.mxu0 0
        %292 = vmatpush1.bf16.msra.mxu0 %v261
        %293 = vmatprep.subr.bf16.mxu0 0
        %294 = vmatpush2.bf16.msra.mxu0 0
        %295 = vmatprep.subr.bf16.mxu0 0
        %296 = vmatpush2.bf16.msra.mxu0 0
        %297 = vmatprep.subr.bf16.mxu0 0
        %298 = vmatpush2.bf16.msra.mxu0 0
        %299 = vmatprep.subr.bf16.mxu0 0
        %300 = vmatpush2.bf16.msra.mxu0 0
        %301 = vmatprep.subr.bf16.mxu0 0
        %302 = vmatpush2.bf16.msra.mxu0 0
        %303 = vmatprep.subr.bf16.mxu0 0
        %304 = vmatpush2.bf16.msra.mxu0 0
        %305 = vmatprep.subr.bf16.mxu0 0
        %306 = vmatpush2.bf16.msra.mxu0 0
        %307 = vmatprep.subr.bf16.mxu0 0
        %308 = vmatpush2.bf16.msra.mxu0 0
        %309 = vmatprep.mubr.bf16.mxu0 0
        %310 = vmatmul.mubr.bf16.gmra.mxu0 %v202
        %v311 = vpop.f32.mrf.mxu0
        %v312 = vadd.f32 %v227, %v311
        %v313 = vpop.f32.mrf.mxu0
        %v314 = vpop.f32.mrf.mxu0
        %v315 = vadd.f32 %v227, %v314
        %v316 = vpop.f32.mrf.mxu0
        %317 = vmatprep.mubr.bf16.mxu0 0
        %318 = vmatmul.mubr.bf16.gmra.mxu0 %v203
        %v319 = vpop.f32.mrf.mxu0
        %v320 = vadd.f32 %v227, %v319
        %v321 = vpop.f32.mrf.mxu0
        %v322 = vpop.f32.mrf.mxu0
        %v323 = vadd.f32 %v227, %v322
        %v324 = vpop.f32.mrf.mxu0
        %325 = vmatprep.mubr.bf16.mxu0 0
        %326 = vmatmul.mubr.bf16.gmra.mxu0 %v204
        %v327 = vpop.f32.mrf.mxu0
        %v328 = vadd.f32 %v227, %v327
        %v329 = vpop.f32.mrf.mxu0
        %v330 = vpop.f32.mrf.mxu0
        %v331 = vadd.f32 %v227, %v330
        %v332 = vpop.f32.mrf.mxu0
        %333 = vmatprep.mubr.bf16.mxu0 0
        %334 = vmatmul.mubr.bf16.gmra.mxu0 %v205
        %v335 = vpop.f32.mrf.mxu0
        %v336 = vadd.f32 %v227, %v335
        %v337 = vpop.f32.mrf.mxu0
        %v338 = vpop.f32.mrf.mxu0
        %v339 = vadd.f32 %v227, %v338
        %v340 = vpop.f32.mrf.mxu0
        %341 = vdwg.mxu0
        %vm342 = vcmask 130048
        %343 = vst.msk [vmem:[%s191] sm:$0xff] %vm342, %v312
        %344 = vst.msk [vmem:[%s191 + $0x8] sm:$0xff] %vm342, %v315
        %345 = vst.msk [vmem:[%s191 + $0x10] sm:$0xff] %vm342, %v320
        %346 = vst.msk [vmem:[%s191 + $0x18] sm:$0xff] %vm342, %v323
        %347 = vst.msk [vmem:[%s191 + $0x20] sm:$0xff] %vm342, %v328
        %348 = vst.msk [vmem:[%s191 + $0x28] sm:$0xff] %vm342, %v331
        %349 = vst.msk [vmem:[%s191 + $0x30] sm:$0xff] %vm342, %v336
        %350 = vst.msk [vmem:[%s191 + $0x38] sm:$0xff] %vm342, %v339
        %s351 = smul.u32 8, %s17
        %p352 = scmp.lt.s32.totalorder %s351, 15
        %s353 = scalar_select %p352, %s351, 15
        %s354 = smul.addr %s353, 8
        %s355 = scalar_lea.vmem %s3, %s354
        // Predicated region
        $region37: #{tpu_custom_call.1} parent=31 // pred_check
          %p356 = pneg %p103
        $region38: #{tpu_custom_call.1} parent=31 // pred_check_branch
          %358 = sbr.rel (%p356) target = $region40
        $region39: #{tpu_custom_call.1} parent=31 // pred_region
          %s359 = smul.u32 8, %s17
        $region40: #{tpu_custom_call.1} parent=31 // pred_fallthru
          _
      $region32: #{tpu_custom_call.1} parent=5 // pred_fallthru
        _
      %p360 = scmp.le.s32.totalorder 2, %s12
      // Predicated region
      $region41: #{tpu_custom_call.1} parent=5 // pred_check
        %p361 = pneg %p360
      $region42: #{tpu_custom_call.1} parent=5 // pred_check_branch
        %363 = sbr.rel (%p361) target = $region44
      $region43: #{tpu_custom_call.1} parent=5 // pred_region
        %s364 = ssub.s32 %s12, 2
        // Predicated region
        $region45: #{tpu_custom_call.1} parent=43 // pred_check
          %p365 = pneg %p109
        $region46: #{tpu_custom_call.1} parent=43 // pred_check_branch
          %367 = sbr.rel (%p365) target = $region48
        $region47: #{tpu_custom_call.1} parent=43 // pred_region
          %s368 = smul.u32 8, %s18
          %p369 = scmp.lt.s32.totalorder %s368, 15
          %s370 = scalar_select %p369, %s368, 15
          %s371 = smul.addr %s370, 8
          %s372 = scalar_lea.vmem %s3, %s371
        $region48: #{tpu_custom_call.1} parent=43 // pred_fallthru
          _
      $region44: #{tpu_custom_call.1} parent=5 // pred_fallthru
        _
    $region6: #{tpu_custom_call.1} parent=1 // loop_footer
      %s16 = sadd.s32 1, %s12
    $region7: #{tpu_custom_call.1} parent=1 // loop_footer_branch
      %11 = sbr.rel target = $region3
    $region8: #{tpu_custom_call.1} parent=1 // loop_exit
      _
    %373 = vsyncpa [#allocation3], 1
    %s374 = scalar_lea.sflag [#allocation3], 1
    %375 = vsyncpa %s374, 1

</llo_original>
